<compile_context>
chip_gen: v6e
topology: v6e:2x2x1
jax: 0.10.0
libtpu: 0.0.40
codegen_flags: <defaults>
</compile_context>

<pallas_src>
from functools import partial

import numpy as np
import jax
import jax.numpy as jnp
from jax import lax
from jax.experimental import pallas as pl
from jax.experimental.pallas import tpu as pltpu


# ------------------------- fused attention kernel -------------------------

def _fused_attention_kernel(
    x_ref, wqkv_ref, bqkv_ref, wproj_ref, bproj_ref,      # data inputs
    qmask_ref, vmask_ref, sbias_ref,                      # constant masks
    y_ref, cls_ref,                                       # outputs
    *, num_heads, seq_len,
):
    N = seq_len
    H = num_heads
    C = x_ref.shape[-1]

    # qkv projection for this batch element: (N, 3C), resident in VMEM.
    x = x_ref[...]
    qkv = (
        jnp.dot(x, wqkv_ref[...], preferred_element_type=jnp.float32)
        + bqkv_ref[...]
    )

    # Head-stacked copies: (H*N, 3C).  Row block h carries the tokens for head h.
    qkv_t = jnp.concatenate([qkv] * H, axis=0)

    # Block-diagonal q (scale folded into the mask) and v; k stays un-masked
    # because off-block score entries are overwritten by the -1e30 bias anyway.
    q_bd = qkv_t[:, 0:C] * qmask_ref[...]                  # (H*N, C)
    k_t = qkv_t[:, C:2 * C]                                # (H*N, C)
    v_bd = qkv_t[:, 2 * C:3 * C] * vmask_ref[...]          # (H*N, C)

    # All-head scores in ONE MXU pass; contraction over the last dim of both
    # operands, so no transposed k is materialized.
    s = lax.dot_general(
        q_bd, k_t, (((1,), (1,)), ((), ())),
        preferred_element_type=jnp.float32,
    )                                                      # (H*N, H*N)
    s = s + sbias_ref[...]                                 # off-block -> -1e30

    # f32 softmax (max subtracted); off-block entries underflow to exactly 0.
    m = jnp.max(s, axis=-1, keepdims=True)
    p = jnp.exp(s - m)
    denom = jnp.sum(p, axis=-1, keepdims=True)
    attn = p * pl.reciprocal(denom, approx=False)          # softmax(dim=-1)

    # All-head (attn @ v) in ONE MXU pass: row block h holds head h's output
    # in channel block h and zeros elsewhere.
    o_bd = jnp.dot(attn, v_bd, preferred_element_type=jnp.float32)  # (H*N, C)

    # Sum the H row blocks -> (N, C) == heads concatenated along channels
    # (== (attn @ v).transpose(1,2).reshape(B, N, C) in the reference).
    out = o_bd[0:N, :]
    for h in range(1, H):
        out = out + o_bd[h * N:(h + 1) * N, :]

    # cls-token query rows (one per head).  Off-block entries are exactly 0,
    # so summing the H rows concatenates the per-head cls rows along lanes,
    # and summing the H lane blocks gives sum_h attn_h[0, :].
    cls_rows = attn[0:1, :]
    for h in range(1, H):
        cls_rows = cls_rows + attn[h * N:h * N + 1, :]     # (1, H*N)
    cls = cls_rows[:, 0:N]
    for h in range(1, H):
        cls = cls + cls_rows[:, h * N:(h + 1) * N]
    cls_ref[...] = cls * (1.0 / H)                         # mean over heads

    # Output projection.
    y_ref[...] = (
        jnp.dot(out, wproj_ref[...], preferred_element_type=jnp.float32)
        + bproj_ref[...]
    )


def _build_masks(num_heads, seq_len, head_dim, scale):
    """Tiny compile-time constants describing the block-diagonal head layout."""
    H, N, hd = num_heads, seq_len, head_dim
    C, HN = H * hd, H * N
    row_head = np.arange(HN)[:, None] // N                 # (HN, 1) head id per row
    col_head = np.arange(C)[None, :] // hd                 # (1, C)  head id per channel
    keep = row_head == col_head
    qmask = np.where(keep, np.float32(scale), np.float32(0.0)).astype(np.float32)
    vmask = keep.astype(np.float32)
    col_blk = np.arange(HN)[None, :] // N                  # (1, HN) head id per score col
    sbias = np.where(row_head == col_blk, 0.0, -1e30).astype(np.float32)
    return jnp.asarray(qmask), jnp.asarray(vmask), jnp.asarray(sbias)


def fused_attention(x, w_qkv, b_qkv, w_proj, b_proj, *, num_heads):
    """x:(B,N,C) -> y:(B,N,C), cls_row:(B,N) = mean_h softmax(q k^T * scale)[:, :, 0, :]."""
    B, N, C = x.shape
    head_dim = C // num_heads
    scale = head_dim ** (-0.5)
    HN = num_heads * N

    qmask, vmask, sbias = _build_masks(num_heads, N, head_dim, scale)

    kern = partial(_fused_attention_kernel, num_heads=num_heads, seq_len=N)

    flops = int(B * (2 * N * C * 3 * C            # qkv projection
                     + 2 * HN * C * HN            # packed scores
                     + 2 * HN * HN * C            # packed attn @ v
                     + 2 * N * C * C))            # output projection
    transcendentals = int(B * HN * HN)            # exp in softmax
    bytes_accessed = int(4 * (x.size + w_qkv.size + b_qkv.size + w_proj.size
                              + b_proj.size + qmask.size + vmask.size + sbias.size
                              + B * N * C + B * N))

    y, cls3 = pl.pallas_call(
        kern,
        out_shape=(
            jax.ShapeDtypeStruct((B, N, C), jnp.float32),
            jax.ShapeDtypeStruct((B, 1, N), jnp.float32),
        ),
        grid=(B,),
        in_specs=[
            pl.BlockSpec((None, N, C), lambda b: (b, 0, 0)),   # x (per-batch tile)
            pl.BlockSpec((C, 3 * C), lambda b: (0, 0)),        # w_qkv (invariant)
            pl.BlockSpec((1, 3 * C), lambda b: (0, 0)),        # b_qkv
            pl.BlockSpec((C, C), lambda b: (0, 0)),            # w_proj
            pl.BlockSpec((1, C), lambda b: (0, 0)),            # b_proj
            pl.BlockSpec((HN, C), lambda b: (0, 0)),           # q mask (scale folded)
            pl.BlockSpec((HN, C), lambda b: (0, 0)),           # v mask
            pl.BlockSpec((HN, HN), lambda b: (0, 0)),          # score bias
        ],
        out_specs=(
            pl.BlockSpec((None, N, C), lambda b: (b, 0, 0)),   # y
            pl.BlockSpec((None, 1, N), lambda b: (b, 0, 0)),   # cls attention row
        ),
        compiler_params=pltpu.CompilerParams(
            dimension_semantics=("parallel",),                 # one batch per TC on v7x
        ),
        cost_estimate=pl.CostEstimate(
            flops=flops, transcendentals=transcendentals,
            bytes_accessed=bytes_accessed,
        ),
    )(x, w_qkv, b_qkv, w_proj, b_proj, qmask, vmask, sbias)

    return y, cls3.reshape(B, N)


# ------------------------------ full forward ------------------------------

def attention_forward(x, params, *, num_heads, trade_off=1.0, global_attn=None):
    """Mirrors Attention.forward (eval mode, dropout p=0; global_attn returned
    functionally instead of mutating a Python global)."""
    B, N, C = x.shape

    y, cls_row = fused_attention(
        x, params["w_qkv"], params["b_qkv"], params["w_proj"], params["b_proj"],
        num_heads=num_heads,
    )

    cls_attn = cls_row[:, 1:]                             # mean(attn[:, :, 0, 1:], dim=1)
    if global_attn is None:
        new_global_attn = cls_attn                        # "isinstance(global_attn, int)" branch
    elif global_attn.shape[1] == N - 1:
        new_global_attn = (1.0 - trade_off) * global_attn + trade_off * cls_attn
    else:
        cls_attn2 = cls_row[:, 1:-1]                      # mean(attn[:, :, 0, 1:-1], dim=1)
        updated = (1.0 - trade_off) * global_attn[:, : N - 2] + trade_off * cls_attn2
        new_global_attn = jnp.concatenate([updated, global_attn[:, N - 2:]], axis=1)

    # TODO(synk): attn_drop / proj_drop are identity in eval mode (p=0); training-mode
    # dropout is not implemented.
    return y, new_global_attn


# ------------------------------- reference --------------------------------

def reference_forward(x, params, *, num_heads):
    B, N, C = x.shape
    hd = C // num_heads
    scale = hd ** (-0.5)
    hp = lax.Precision.HIGHEST
    qkv = jnp.dot(x, params["w_qkv"], precision=hp) + params["b_qkv"]
    qkv = qkv.reshape(B, N, 3, num_heads, hd).transpose(2, 0, 3, 1, 4)
    q, k, v = qkv[0], qkv[1], qkv[2]
    attn = jax.nn.softmax(
        jnp.einsum("bhqd,bhkd->bhqk", q, k, precision=hp) * scale, axis=-1)
    cls_attn = jnp.mean(attn[:, :, 0, 1:], axis=1)
    y = jnp.einsum("bhqk,bhkd->bhqd", attn, v, precision=hp)
    y = y.transpose(0, 2, 1, 3).reshape(B, N, C)
    y = jnp.dot(y, params["w_proj"], precision=hp) + params["b_proj"]
    return y, cls_attn


# --------------------------------- main ------------------------------------

if __name__ == "__main__":
    B, N, C, H = 2, 17, 32, 4      # N = 1 cls token + 16 patch tokens
    key = jax.random.PRNGKey(0)
    k1, k2, k3, k4 = jax.random.split(key, 4)

    x = jax.random.normal(k1, (B, N, C), jnp.float32)
    params = {
        # weights stored as (in, out): equivalent to PyTorch x @ W.T with W:(out,in)
        "w_qkv": 0.02 * jax.random.normal(k2, (C, 3 * C), jnp.float32),
        "b_qkv": jnp.zeros((1, 3 * C), jnp.float32),       # qkv_bias=False
        "w_proj": 0.02 * jax.random.normal(k3, (C, C), jnp.float32),
        "b_proj": 0.02 * jax.random.normal(k4, (1, C), jnp.float32),
    }

    y, g_attn = attention_forward(x, params, num_heads=H, trade_off=1.0, global_attn=None)
    jax.block_until_ready((y, g_attn))

    y_ref, g_ref = reference_forward(x, params, num_heads=H)
    assert y.shape == (B, N, C) and g_attn.shape == (B, N - 1)
    assert jnp.allclose(y, y_ref, atol=2e-3, rtol=2e-3), "output mismatch"
    assert jnp.allclose(g_attn, g_ref, atol=2e-3, rtol=2e-3), "global_attn mismatch"

    print("KERNEL_OK")
</pallas_src>

<mosaic_0001>
module attributes {stable_mosaic.version = 11 : i64} {
  func.func @_fused_attention_kernel(%arg0: i32, %arg1: memref<1x17x32xf32, #tpu.memory_space<vmem>>, %arg2: memref<32x96xf32, #tpu.memory_space<vmem>>, %arg3: memref<1x96xf32, #tpu.memory_space<vmem>>, %arg4: memref<32x32xf32, #tpu.memory_space<vmem>>, %arg5: memref<1x32xf32, #tpu.memory_space<vmem>>, %arg6: memref<68x32xf32, #tpu.memory_space<vmem>>, %arg7: memref<68x32xf32, #tpu.memory_space<vmem>>, %arg8: memref<68x68xf32, #tpu.memory_space<vmem>>, %arg9: memref<1x17x32xf32, #tpu.memory_space<vmem>>, %arg10: memref<1x1x17xf32, #tpu.memory_space<vmem>>) attributes {dimension_semantics = [#tpu.dimension_semantics<parallel>], iteration_bounds = array<i64: 2>, scalar_prefetch = 0 : i64, scratch_operands = 0 : i64, tpu.core_type = #tpu.core_type<tc>, window_params = [{transform_indices = @transform_0, window_bounds = array<i64: 1, 17, 32>}, {pipeline_mode = #tpu.pipeline_mode<synchronous>, transform_indices = @transform_1, window_bounds = array<i64: 32, 96>}, {pipeline_mode = #tpu.pipeline_mode<synchronous>, transform_indices = @transform_2, window_bounds = array<i64: 1, 96>}, {pipeline_mode = #tpu.pipeline_mode<synchronous>, transform_indices = @transform_3, window_bounds = array<i64: 32, 32>}, {pipeline_mode = #tpu.pipeline_mode<synchronous>, transform_indices = @transform_4, window_bounds = array<i64: 1, 32>}, {pipeline_mode = #tpu.pipeline_mode<synchronous>, transform_indices = @transform_5, window_bounds = array<i64: 68, 32>}, {pipeline_mode = #tpu.pipeline_mode<synchronous>, transform_indices = @transform_6, window_bounds = array<i64: 68, 32>}, {pipeline_mode = #tpu.pipeline_mode<synchronous>, transform_indices = @transform_7, window_bounds = array<i64: 68, 68>}, {transform_indices = @transform_8, window_bounds = array<i64: 1, 17, 32>}, {transform_indices = @transform_9, window_bounds = array<i64: 1, 1, 17>}]} {
    %c0 = arith.constant 0 : index
    %c0_0 = arith.constant 0 : index
    %c0_1 = arith.constant 0 : index
    %0 = vector.load %arg1[%c0, %c0_0, %c0_1] : memref<1x17x32xf32, #tpu.memory_space<vmem>>, vector<1x17x32xf32>
    %1 = vector.shape_cast %0 : vector<1x17x32xf32> to vector<17x32xf32>
    %c0_2 = arith.constant 0 : index
    %c0_3 = arith.constant 0 : index
    %2 = vector.load %arg2[%c0_2, %c0_3] : memref<32x96xf32, #tpu.memory_space<vmem>>, vector<32x96xf32>
    %cst = arith.constant dense<0.000000e+00> : vector<17x96xf32>
    %3 = tpu.matmul %1, %2, %cst {dimension_numbers = #tpu.dot_dimension_numbers<[1], [0], [0], [1], [0, 0, 1, 1], [], []>} : vector<17x32xf32>, vector<32x96xf32>, vector<17x96xf32> -> vector<17x96xf32>
    %c0_4 = arith.constant 0 : index
    %c0_5 = arith.constant 0 : index
    %4 = vector.load %arg3[%c0_4, %c0_5] : memref<1x96xf32, #tpu.memory_space<vmem>>, vector<1x96xf32>
    %5 = vector.broadcast %4 : vector<1x96xf32> to vector<17x96xf32>
    %6 = arith.addf %3, %5 : vector<17x96xf32>
    %7 = tpu.concatenate %6, %6, %6, %6 in 0 : vector<17x96xf32>, vector<17x96xf32>, vector<17x96xf32>, vector<17x96xf32> -> vector<68x96xf32>
    %8 = vector.extract_strided_slice %7 {offsets = [0, 0], sizes = [68, 32], strides = [1, 1]} : vector<68x96xf32> to vector<68x32xf32>
    %c0_6 = arith.constant 0 : index
    %c0_7 = arith.constant 0 : index
    %9 = vector.load %arg6[%c0_6, %c0_7] : memref<68x32xf32, #tpu.memory_space<vmem>>, vector<68x32xf32>
    %10 = arith.mulf %8, %9 : vector<68x32xf32>
    %11 = vector.extract_strided_slice %7 {offsets = [0, 32], sizes = [68, 32], strides = [1, 1]} : vector<68x96xf32> to vector<68x32xf32>
    %12 = vector.extract_strided_slice %7 {offsets = [0, 64], sizes = [68, 32], strides = [1, 1]} : vector<68x96xf32> to vector<68x32xf32>
    %c0_8 = arith.constant 0 : index
    %c0_9 = arith.constant 0 : index
    %13 = vector.load %arg7[%c0_8, %c0_9] : memref<68x32xf32, #tpu.memory_space<vmem>>, vector<68x32xf32>
    %14 = arith.mulf %12, %13 : vector<68x32xf32>
    %cst_10 = arith.constant dense<0.000000e+00> : vector<68x68xf32>
    %15 = tpu.matmul %10, %11, %cst_10 {dimension_numbers = #tpu.dot_dimension_numbers<[1], [1], [0], [0], [0, 0, 1, 0], [], []>} : vector<68x32xf32>, vector<68x32xf32>, vector<68x68xf32> -> vector<68x68xf32>
    %c0_11 = arith.constant 0 : index
    %c0_12 = arith.constant 0 : index
    %16 = vector.load %arg8[%c0_11, %c0_12] : memref<68x68xf32, #tpu.memory_space<vmem>>, vector<68x68xf32>
    %17 = arith.addf %15, %16 : vector<68x68xf32>
    %cst_13 = arith.constant dense<0xFF800000> : vector<68xf32>
    %18 = vector.multi_reduction <maximumf>, %17, %cst_13 [1] : vector<68x68xf32> to vector<68xf32>
    %19 = vector.shape_cast %18 : vector<68xf32> to vector<68x1xf32>
    %20 = vector.broadcast %19 : vector<68x1xf32> to vector<68x68xf32>
    %21 = arith.subf %17, %20 : vector<68x68xf32>
    %22 = math.exp %21 : vector<68x68xf32>
    %cst_14 = arith.constant dense<0.000000e+00> : vector<68xf32>
    %23 = vector.multi_reduction <add>, %22, %cst_14 [1] : vector<68x68xf32> to vector<68xf32>
    %24 = vector.shape_cast %23 : vector<68xf32> to vector<68x1xf32>
    %25 = tpu.reciprocal %24 : vector<68x1xf32> -> vector<68x1xf32>
    %26 = vector.broadcast %25 : vector<68x1xf32> to vector<68x68xf32>
    %27 = arith.mulf %22, %26 : vector<68x68xf32>
    %cst_15 = arith.constant dense<0.000000e+00> : vector<68x32xf32>
    %28 = tpu.matmul %27, %14, %cst_15 {dimension_numbers = #tpu.dot_dimension_numbers<[1], [0], [0], [1], [0, 0, 1, 1], [], []>} : vector<68x68xf32>, vector<68x32xf32>, vector<68x32xf32> -> vector<68x32xf32>
    %29 = vector.extract_strided_slice %28 {offsets = [0, 0], sizes = [17, 32], strides = [1, 1]} : vector<68x32xf32> to vector<17x32xf32>
    %30 = vector.extract_strided_slice %28 {offsets = [17, 0], sizes = [17, 32], strides = [1, 1]} : vector<68x32xf32> to vector<17x32xf32>
    %31 = arith.addf %29, %30 : vector<17x32xf32>
    %32 = vector.extract_strided_slice %28 {offsets = [34, 0], sizes = [17, 32], strides = [1, 1]} : vector<68x32xf32> to vector<17x32xf32>
    %33 = arith.addf %31, %32 : vector<17x32xf32>
    %34 = vector.extract_strided_slice %28 {offsets = [51, 0], sizes = [17, 32], strides = [1, 1]} : vector<68x32xf32> to vector<17x32xf32>
    %35 = arith.addf %33, %34 : vector<17x32xf32>
    %36 = vector.extract_strided_slice %27 {offsets = [0, 0], sizes = [1, 68], strides = [1, 1]} : vector<68x68xf32> to vector<1x68xf32>
    %37 = vector.extract_strided_slice %27 {offsets = [17, 0], sizes = [1, 68], strides = [1, 1]} : vector<68x68xf32> to vector<1x68xf32>
    %38 = arith.addf %36, %37 : vector<1x68xf32>
    %39 = vector.extract_strided_slice %27 {offsets = [34, 0], sizes = [1, 68], strides = [1, 1]} : vector<68x68xf32> to vector<1x68xf32>
    %40 = arith.addf %38, %39 : vector<1x68xf32>
    %41 = vector.extract_strided_slice %27 {offsets = [51, 0], sizes = [1, 68], strides = [1, 1]} : vector<68x68xf32> to vector<1x68xf32>
    %42 = arith.addf %40, %41 : vector<1x68xf32>
    %43 = vector.extract_strided_slice %42 {offsets = [0, 0], sizes = [1, 17], strides = [1, 1]} : vector<1x68xf32> to vector<1x17xf32>
    %44 = vector.extract_strided_slice %42 {offsets = [0, 17], sizes = [1, 17], strides = [1, 1]} : vector<1x68xf32> to vector<1x17xf32>
    %45 = arith.addf %43, %44 : vector<1x17xf32>
    %46 = vector.extract_strided_slice %42 {offsets = [0, 34], sizes = [1, 17], strides = [1, 1]} : vector<1x68xf32> to vector<1x17xf32>
    %47 = arith.addf %45, %46 : vector<1x17xf32>
    %48 = vector.extract_strided_slice %42 {offsets = [0, 51], sizes = [1, 17], strides = [1, 1]} : vector<1x68xf32> to vector<1x17xf32>
    %49 = arith.addf %47, %48 : vector<1x17xf32>
    %cst_16 = arith.constant 2.500000e-01 : f32
    %50 = vector.broadcast %cst_16 : f32 to vector<1x17xf32>
    %51 = arith.mulf %49, %50 : vector<1x17xf32>
    %c0_17 = arith.constant 0 : index
    %c0_18 = arith.constant 0 : index
    %c0_19 = arith.constant 0 : index
    %52 = vector.load %arg10[%c0_17, %c0_18, %c0_19] : memref<1x1x17xf32, #tpu.memory_space<vmem>>, vector<1x1x17xf32>
    %53 = vector.shape_cast %52 : vector<1x1x17xf32> to vector<1x17xf32>
    %54 = vector.shape_cast %51 : vector<1x17xf32> to vector<1x1x17xf32>
    tpu.vector_store %arg10[%c0_17, %c0_18, %c0_19], %54 {strides = array<i32>} : memref<1x1x17xf32, #tpu.memory_space<vmem>>, vector<1x1x17xf32>,
    %c0_20 = arith.constant 0 : index
    %c0_21 = arith.constant 0 : index
    %55 = vector.load %arg4[%c0_20, %c0_21] : memref<32x32xf32, #tpu.memory_space<vmem>>, vector<32x32xf32>
    %cst_22 = arith.constant dense<0.000000e+00> : vector<17x32xf32>
    %56 = tpu.matmul %35, %55, %cst_22 {dimension_numbers = #tpu.dot_dimension_numbers<[1], [0], [0], [1], [0, 0, 1, 1], [], []>} : vector<17x32xf32>, vector<32x32xf32>, vector<17x32xf32> -> vector<17x32xf32>
    %c0_23 = arith.constant 0 : index
    %c0_24 = arith.constant 0 : index
    %57 = vector.load %arg5[%c0_23, %c0_24] : memref<1x32xf32, #tpu.memory_space<vmem>>, vector<1x32xf32>
    %58 = vector.broadcast %57 : vector<1x32xf32> to vector<17x32xf32>
    %59 = arith.addf %56, %58 : vector<17x32xf32>
    %c0_25 = arith.constant 0 : index
    %c0_26 = arith.constant 0 : index
    %c0_27 = arith.constant 0 : index
    %60 = vector.load %arg9[%c0_25, %c0_26, %c0_27] : memref<1x17x32xf32, #tpu.memory_space<vmem>>, vector<1x17x32xf32>
    %61 = vector.shape_cast %60 : vector<1x17x32xf32> to vector<17x32xf32>
    %62 = vector.shape_cast %59 : vector<17x32xf32> to vector<1x17x32xf32>
    tpu.vector_store %arg9[%c0_25, %c0_26, %c0_27], %62 {strides = array<i32>} : memref<1x17x32xf32, #tpu.memory_space<vmem>>, vector<1x17x32xf32>,
    return
  }
  func.func @transform_0(%arg0: i32) -> (i32, i32, i32) {
    %c0_i32 = arith.constant 0 : i32
    %c0_i32_0 = arith.constant 0 : i32
    %c0_i32_1 = arith.constant 0 : i32
    return %arg0, %c0_i32, %c0_i32_0 : i32, i32, i32
  }
  func.func @transform_1(%arg0: i32) -> (i32, i32) {
    %c0_i32 = arith.constant 0 : i32
    %c0_i32_0 = arith.constant 0 : i32
    %c0_i32_1 = arith.constant 0 : i32
    return %c0_i32, %c0_i32_0 : i32, i32
  }
  func.func @transform_2(%arg0: i32) -> (i32, i32) {
    %c0_i32 = arith.constant 0 : i32
    %c0_i32_0 = arith.constant 0 : i32
    %c0_i32_1 = arith.constant 0 : i32
    return %c0_i32, %c0_i32_0 : i32, i32
  }
  func.func @transform_3(%arg0: i32) -> (i32, i32) {
    %c0_i32 = arith.constant 0 : i32
    %c0_i32_0 = arith.constant 0 : i32
    %c0_i32_1 = arith.constant 0 : i32
    return %c0_i32, %c0_i32_0 : i32, i32
  }
  func.func @transform_4(%arg0: i32) -> (i32, i32) {
    %c0_i32 = arith.constant 0 : i32
    %c0_i32_0 = arith.constant 0 : i32
    %c0_i32_1 = arith.constant 0 : i32
    return %c0_i32, %c0_i32_0 : i32, i32
  }
  func.func @transform_5(%arg0: i32) -> (i32, i32) {
    %c0_i32 = arith.constant 0 : i32
    %c0_i32_0 = arith.constant 0 : i32
    %c0_i32_1 = arith.constant 0 : i32
    return %c0_i32, %c0_i32_0 : i32, i32
  }
  func.func @transform_6(%arg0: i32) -> (i32, i32) {
    %c0_i32 = arith.constant 0 : i32
    %c0_i32_0 = arith.constant 0 : i32
    %c0_i32_1 = arith.constant 0 : i32
    return %c0_i32, %c0_i32_0 : i32, i32
  }
  func.func @transform_7(%arg0: i32) -> (i32, i32) {
    %c0_i32 = arith.constant 0 : i32
    %c0_i32_0 = arith.constant 0 : i32
    %c0_i32_1 = arith.constant 0 : i32
    return %c0_i32, %c0_i32_0 : i32, i32
  }
  func.func @transform_8(%arg0: i32) -> (i32, i32, i32) {
    %c0_i32 = arith.constant 0 : i32
    %c0_i32_0 = arith.constant 0 : i32
    %c0_i32_1 = arith.constant 0 : i32
    return %arg0, %c0_i32, %c0_i32_0 : i32, i32, i32
  }
  func.func @transform_9(%arg0: i32) -> (i32, i32, i32) {
    %c0_i32 = arith.constant 0 : i32
    %c0_i32_0 = arith.constant 0 : i32
    %c0_i32_1 = arith.constant 0 : i32
    return %arg0, %c0_i32, %c0_i32_0 : i32, i32, i32
  }
}

</mosaic_0001>

<llo_original>
// kernel: tpu_custom_call.1
$region0: #{tpu_custom_call.1}
  #allocation0 [shape = 'u32[]', space=smem, size = 0x4, offset = 0x4, fixed_abs, tag = 'smem constant byte address 0x4 - core index']
  #allocation1 [shape = 'u32[144,128]{1,0:T(1,128)}', space=vmem, size = 0x12000, scoped, tag = 'internal scratch']
  %s0 = inlined_call_operand.vmem [shape: f32[2,17,32], index: 0, kind: input, shape index: {}]
  %s1 = inlined_call_operand.vmem [shape: f32[32,96], index: 1, kind: input, shape index: {}]
  %s2 = inlined_call_operand.vmem [shape: f32[1,96], index: 2, kind: input, shape index: {}]
  %s3 = inlined_call_operand.vmem [shape: f32[32,32], index: 3, kind: input, shape index: {}]
  %s4 = inlined_call_operand.vmem [shape: f32[1,32], index: 4, kind: input, shape index: {}]
  %s5 = inlined_call_operand.vmem [shape: f32[68,32], index: 5, kind: input, shape index: {}]
  %s6 = inlined_call_operand.vmem [shape: f32[68,32], index: 6, kind: input, shape index: {}]
  %s7 = inlined_call_operand.vmem [shape: f32[68,68], index: 7, kind: input, shape index: {}]
  %s8 = inlined_call_operand.vmem [shape: f32[2,17,32], index: 8, kind: output, shape index: {0}]
  %s9 = inlined_call_operand.hbm [shape: f32[2,1,17], index: 9, kind: output, shape index: {1}]
  %10 = xla_tuple %s8, %s9
  %s11 = sld [smem:[#allocation0]]
  $region73: #{tpu_custom_call.1} parent=0
    _
  %s13 = ssub.s32 1, %s11
  %s14 = scalar_select 0, %s13, %s11
  $region1: #{tpu_custom_call.1} parent=0
    #allocation2 [shape = 'u8[1024]{0}', space=vmem, size = 0x400, scoped, tag = 'output window, operand 1']
    #allocation3 [shape = 's32[2]{0}', space=sflag, size = 0x8, scoped, tag = 'scoped memory for tpu_custom_call.1']
    %15 = vsyncpa [#allocation3], 0
    %s16 = scalar_lea.sflag [#allocation3], 1
    %17 = vsyncpa %s16, 0
    loop: start=0, step=1, limit=4
    $region2: #{tpu_custom_call.1} parent=1 // loop_pre_header
      _
    $region3: #{tpu_custom_call.1} parent=1 // loop_header
      %s19 = sphi 0, %s23
      %p20 = scmp.ge.s32.totalorder %s19, 4
      %s29 = sphi 0, %s31
      %s32 = sphi 0, %s29
      %s33 = sphi 0, %s32
      %s49 = sphi 0, %s33
      %s53 = sphi 0, %s53
      %s55 = sphi 0, %s53
      %s56 = sphi 0, %s55
      %s70 = sphi 0, %s56
      %s74 = sphi 0, %s74
      %s76 = sphi 0, %s74
      %s77 = sphi 0, %s76
      %s91 = sphi 0, %s77
      %s95 = sphi 0, %s95
      %s97 = sphi 0, %s95
      %s98 = sphi 0, %s97
      %s112 = sphi 0, %s98
      %s116 = sphi 0, %s116
      %s118 = sphi 0, %s116
      %s119 = sphi 0, %s118
      %s133 = sphi 0, %s119
      %s137 = sphi 0, %s137
      %s139 = sphi 0, %s137
      %s140 = sphi 0, %s139
      %s154 = sphi 0, %s140
      %s158 = sphi 0, %s158
      %s160 = sphi 0, %s158
      %s161 = sphi 0, %s160
      %s175 = sphi 0, %s161
      %s179 = sphi 0, %s179
      %s181 = sphi 0, %s179
      %s182 = sphi 0, %s181
      %s196 = sphi 0, %s182
      %s202 = sphi 0, %s204
      %s205 = sphi 0, %s202
      %s206 = sphi 0, %s205
      %s222 = sphi 0, %s206
      %s228 = sphi 0, %s230
      %s231 = sphi 0, %s228
      %s232 = sphi 0, %s231
      %s248 = sphi 0, %s232
    $region4: #{tpu_custom_call.1} parent=1 // loop_header_branch
      %22 = sbr.rel (%p20) target = $region8
    $region5: #{tpu_custom_call.1} parent=1 // loop_body
      %s24 = ssub.s32 %s19, 1
      %s25 = ssub.s32 %s19, 2
      %s26 = sadd.s32 %s19, 1
      %s27 = ssub.s32 %s19, %s26
      %p28 = scmp.eq.s32.totalorder %s27, 0
      %s30 = sadd.s32 %s29, 1
      %s31 = scalar_select %p28, %s29, %s30
      %p34 = pneg %p28
      %p35 = scmp.eq.s32.totalorder %s19, 1
      %p36 = por %p34, %p35
      %p37 = scmp.ne.s32.totalorder %s29, %s32
      %p38 = scmp.eq.s32.totalorder %s19, 0
      %p39 = por %p37, %p38
      %p40 = scmp.ne.s32.totalorder %s29, %s32
      %p41 = scmp.eq.s32.totalorder %s24, 1
      %p42 = por %p40, %p41
      %p43 = scmp.ne.s32.totalorder %s32, %s33
      %p44 = scmp.eq.s32.totalorder %s24, 0
      %p45 = por %p43, %p44
      %p46 = scmp.ne.s32.totalorder %s32, %s33
      %p47 = scmp.eq.s32.totalorder %s25, 1
      %p48 = por %p46, %p47
      %p50 = scmp.ne.s32.totalorder %s33, %s49
      %p51 = scmp.eq.s32.totalorder %s25, 0
      %p52 = por %p50, %p51
      %s54 = sadd.s32 %s53, 1
      %p57 = scmp.eq.s32.totalorder %s19, 1
      %p58 = scmp.ne.s32.totalorder %s53, %s55
      %p59 = scmp.eq.s32.totalorder %s19, 0
      %p60 = por %p58, %p59
      %p61 = scmp.ne.s32.totalorder %s53, %s55
      %p62 = scmp.eq.s32.totalorder %s24, 1
      %p63 = por %p61, %p62
      %p64 = scmp.ne.s32.totalorder %s55, %s56
      %p65 = scmp.eq.s32.totalorder %s24, 0
      %p66 = por %p64, %p65
      %p67 = scmp.ne.s32.totalorder %s55, %s56
      %p68 = scmp.eq.s32.totalorder %s25, 1
      %p69 = por %p67, %p68
      %p71 = scmp.ne.s32.totalorder %s56, %s70
      %p72 = scmp.eq.s32.totalorder %s25, 0
      %p73 = por %p71, %p72
      %s75 = sadd.s32 %s74, 1
      %p78 = scmp.eq.s32.totalorder %s19, 1
      %p79 = scmp.ne.s32.totalorder %s74, %s76
      %p80 = scmp.eq.s32.totalorder %s19, 0
      %p81 = por %p79, %p80
      %p82 = scmp.ne.s32.totalorder %s74, %s76
      %p83 = scmp.eq.s32.totalorder %s24, 1
      %p84 = por %p82, %p83
      %p85 = scmp.ne.s32.totalorder %s76, %s77
      %p86 = scmp.eq.s32.totalorder %s24, 0
      %p87 = por %p85, %p86
      %p88 = scmp.ne.s32.totalorder %s76, %s77
      %p89 = scmp.eq.s32.totalorder %s25, 1
      %p90 = por %p88, %p89
      %p92 = scmp.ne.s32.totalorder %s77, %s91
      %p93 = scmp.eq.s32.totalorder %s25, 0
      %p94 = por %p92, %p93
      %s96 = sadd.s32 %s95, 1
      %p99 = scmp.eq.s32.totalorder %s19, 1
      %p100 = scmp.ne.s32.totalorder %s95, %s97
      %p101 = scmp.eq.s32.totalorder %s19, 0
      %p102 = por %p100, %p101
      %p103 = scmp.ne.s32.totalorder %s95, %s97
      %p104 = scmp.eq.s32.totalorder %s24, 1
      %p105 = por %p103, %p104
      %p106 = scmp.ne.s32.totalorder %s97, %s98
      %p107 = scmp.eq.s32.totalorder %s24, 0
      %p108 = por %p106, %p107
      %p109 = scmp.ne.s32.totalorder %s97, %s98
      %p110 = scmp.eq.s32.totalorder %s25, 1
      %p111 = por %p109, %p110
      %p113 = scmp.ne.s32.totalorder %s98, %s112
      %p114 = scmp.eq.s32.totalorder %s25, 0
      %p115 = por %p113, %p114
      %s117 = sadd.s32 %s116, 1
      %p120 = scmp.eq.s32.totalorder %s19, 1
      %p121 = scmp.ne.s32.totalorder %s116, %s118
      %p122 = scmp.eq.s32.totalorder %s19, 0
      %p123 = por %p121, %p122
      %p124 = scmp.ne.s32.totalorder %s116, %s118
      %p125 = scmp.eq.s32.totalorder %s24, 1
      %p126 = por %p124, %p125
      %p127 = scmp.ne.s32.totalorder %s118, %s119
      %p128 = scmp.eq.s32.totalorder %s24, 0
      %p129 = por %p127, %p128
      %p130 = scmp.ne.s32.totalorder %s118, %s119
      %p131 = scmp.eq.s32.totalorder %s25, 1
      %p132 = por %p130, %p131
      %p134 = scmp.ne.s32.totalorder %s119, %s133
      %p135 = scmp.eq.s32.totalorder %s25, 0
      %p136 = por %p134, %p135
      %s138 = sadd.s32 %s137, 1
      %p141 = scmp.eq.s32.totalorder %s19, 1
      %p142 = scmp.ne.s32.totalorder %s137, %s139
      %p143 = scmp.eq.s32.totalorder %s19, 0
      %p144 = por %p142, %p143
      %p145 = scmp.ne.s32.totalorder %s137, %s139
      %p146 = scmp.eq.s32.totalorder %s24, 1
      %p147 = por %p145, %p146
      %p148 = scmp.ne.s32.totalorder %s139, %s140
      %p149 = scmp.eq.s32.totalorder %s24, 0
      %p150 = por %p148, %p149
      %p151 = scmp.ne.s32.totalorder %s139, %s140
      %p152 = scmp.eq.s32.totalorder %s25, 1
      %p153 = por %p151, %p152
      %p155 = scmp.ne.s32.totalorder %s140, %s154
      %p156 = scmp.eq.s32.totalorder %s25, 0
      %p157 = por %p155, %p156
      %s159 = sadd.s32 %s158, 1
      %p162 = scmp.eq.s32.totalorder %s19, 1
      %p163 = scmp.ne.s32.totalorder %s158, %s160
      %p164 = scmp.eq.s32.totalorder %s19, 0
      %p165 = por %p163, %p164
      %p166 = scmp.ne.s32.totalorder %s158, %s160
      %p167 = scmp.eq.s32.totalorder %s24, 1
      %p168 = por %p166, %p167
      %p169 = scmp.ne.s32.totalorder %s160, %s161
      %p170 = scmp.eq.s32.totalorder %s24, 0
      %p171 = por %p169, %p170
      %p172 = scmp.ne.s32.totalorder %s160, %s161
      %p173 = scmp.eq.s32.totalorder %s25, 1
      %p174 = por %p172, %p173
      %p176 = scmp.ne.s32.totalorder %s161, %s175
      %p177 = scmp.eq.s32.totalorder %s25, 0
      %p178 = por %p176, %p177
      %s180 = sadd.s32 %s179, 1
      %p183 = scmp.eq.s32.totalorder %s19, 1
      %p184 = scmp.ne.s32.totalorder %s179, %s181
      %p185 = scmp.eq.s32.totalorder %s19, 0
      %p186 = por %p184, %p185
      %p187 = scmp.ne.s32.totalorder %s179, %s181
      %p188 = scmp.eq.s32.totalorder %s24, 1
      %p189 = por %p187, %p188
      %p190 = scmp.ne.s32.totalorder %s181, %s182
      %p191 = scmp.eq.s32.totalorder %s24, 0
      %p192 = por %p190, %p191
      %p193 = scmp.ne.s32.totalorder %s181, %s182
      %p194 = scmp.eq.s32.totalorder %s25, 1
      %p195 = por %p193, %p194
      %p197 = scmp.ne.s32.totalorder %s182, %s196
      %p198 = scmp.eq.s32.totalorder %s25, 0
      %p199 = por %p197, %p198
      %s200 = ssub.s32 %s19, %s26
      %p201 = scmp.eq.s32.totalorder %s200, 0
      %s203 = sadd.s32 %s202, 1
      %s204 = scalar_select %p201, %s202, %s203
      %p207 = pneg %p201
      %p208 = scmp.eq.s32.totalorder %s19, 1
      %p209 = por %p207, %p208
      %p210 = scmp.ne.s32.totalorder %s202, %s205
      %p211 = scmp.eq.s32.totalorder %s19, 0
      %p212 = por %p210, %p211
      %p213 = scmp.ne.s32.totalorder %s202, %s205
      %p214 = scmp.eq.s32.totalorder %s24, 1
      %p215 = por %p213, %p214
      %p216 = scmp.ne.s32.totalorder %s205, %s206
      %p217 = scmp.eq.s32.totalorder %s24, 0
      %p218 = por %p216, %p217
      %p219 = scmp.ne.s32.totalorder %s205, %s206
      %p220 = scmp.eq.s32.totalorder %s25, 1
      %p221 = por %p219, %p220
      %p223 = scmp.ne.s32.totalorder %s206, %s222
      %p224 = scmp.eq.s32.totalorder %s25, 0
      %p225 = por %p223, %p224
      %s226 = ssub.s32 %s19, %s26
      %p227 = scmp.eq.s32.totalorder %s226, 0
      %s229 = sadd.s32 %s228, 1
      %s230 = scalar_select %p227, %s228, %s229
      %p233 = pneg %p227
      %p234 = scmp.eq.s32.totalorder %s19, 1
      %p235 = por %p233, %p234
      %p236 = scmp.ne.s32.totalorder %s228, %s231
      %p237 = scmp.eq.s32.totalorder %s19, 0
      %p238 = por %p236, %p237
      %p239 = scmp.ne.s32.totalorder %s228, %s231
      %p240 = scmp.eq.s32.totalorder %s24, 1
      %p241 = por %p239, %p240
      %p242 = scmp.ne.s32.totalorder %s231, %s232
      %p243 = scmp.eq.s32.totalorder %s24, 0
      %p244 = por %p242, %p243
      %p245 = scmp.ne.s32.totalorder %s231, %s232
      %p246 = scmp.eq.s32.totalorder %s25, 1
      %p247 = por %p245, %p246
      %p249 = scmp.ne.s32.totalorder %s232, %s248
      %p250 = scmp.eq.s32.totalorder %s25, 0
      %p251 = por %p249, %p250
      %p252 = scmp.le.s32.totalorder 1, %s19
      %p253 = scmp.lt.s32.totalorder %s19, 3
      %p254 = pnand %p252, %p253
      %p255 = pneg %p254
      // Predicated region
      $region9: #{tpu_custom_call.1} parent=5 // pred_check
        _
      $region10: #{tpu_custom_call.1} parent=5 // pred_check_branch
        %257 = sbr.rel (%p254) target = $region12
      $region11: #{tpu_custom_call.1} parent=5 // pred_region
        %s258 = ssub.s32 %s19, 1
        // Predicated region
        $region13: #{tpu_custom_call.1} parent=11 // pred_check
          %p259 = pneg %p66
        $region14: #{tpu_custom_call.1} parent=11 // pred_check_branch
          %261 = sbr.rel (%p259) target = $region16
        $region15: #{tpu_custom_call.1} parent=11 // pred_region
          _
        $region16: #{tpu_custom_call.1} parent=11 // pred_fallthru
          _
        // Predicated region
        $region17: #{tpu_custom_call.1} parent=11 // pred_check
          %p262 = pneg %p87
        $region18: #{tpu_custom_call.1} parent=11 // pred_check_branch
          %264 = sbr.rel (%p262) target = $region20
        $region19: #{tpu_custom_call.1} parent=11 // pred_region
          _
        $region20: #{tpu_custom_call.1} parent=11 // pred_fallthru
          _
        // Predicated region
        $region21: #{tpu_custom_call.1} parent=11 // pred_check
          %p265 = pneg %p108
        $region22: #{tpu_custom_call.1} parent=11 // pred_check_branch
          %267 = sbr.rel (%p265) target = $region24
        $region23: #{tpu_custom_call.1} parent=11 // pred_region
          _
        $region24: #{tpu_custom_call.1} parent=11 // pred_fallthru
          _
        // Predicated region
        $region25: #{tpu_custom_call.1} parent=11 // pred_check
          %p268 = pneg %p129
        $region26: #{tpu_custom_call.1} parent=11 // pred_check_branch
          %270 = sbr.rel (%p268) target = $region28
        $region27: #{tpu_custom_call.1} parent=11 // pred_region
          _
        $region28: #{tpu_custom_call.1} parent=11 // pred_fallthru
          _
        // Predicated region
        $region29: #{tpu_custom_call.1} parent=11 // pred_check
          %p271 = pneg %p150
        $region30: #{tpu_custom_call.1} parent=11 // pred_check_branch
          %273 = sbr.rel (%p271) target = $region32
        $region31: #{tpu_custom_call.1} parent=11 // pred_region
          _
        $region32: #{tpu_custom_call.1} parent=11 // pred_fallthru
          _
        // Predicated region
        $region33: #{tpu_custom_call.1} parent=11 // pred_check
          %p274 = pneg %p171
        $region34: #{tpu_custom_call.1} parent=11 // pred_check_branch
          %276 = sbr.rel (%p274) target = $region36
        $region35: #{tpu_custom_call.1} parent=11 // pred_region
          _
        $region36: #{tpu_custom_call.1} parent=11 // pred_fallthru
          _
        // Predicated region
        $region37: #{tpu_custom_call.1} parent=11 // pred_check
          %p277 = pneg %p192
        $region38: #{tpu_custom_call.1} parent=11 // pred_check_branch
          %279 = sbr.rel (%p277) target = $region40
        $region39: #{tpu_custom_call.1} parent=11 // pred_region
          _
        $region40: #{tpu_custom_call.1} parent=11 // pred_fallthru
          _
      $region12: #{tpu_custom_call.1} parent=5 // pred_fallthru
        _
      %p280 = scmp.lt.s32.totalorder %s19, 2
      // Predicated region
      $region41: #{tpu_custom_call.1} parent=5 // pred_check
        %p281 = pneg %p280
      $region42: #{tpu_custom_call.1} parent=5 // pred_check_branch
        %283 = sbr.rel (%p281) target = $region44
      $region43: #{tpu_custom_call.1} parent=5 // pred_region
        // Predicated region
        $region45: #{tpu_custom_call.1} parent=43 // pred_check
          %p284 = pneg %p39
        $region46: #{tpu_custom_call.1} parent=43 // pred_check_branch
          %286 = sbr.rel (%p284) target = $region48
        $region47: #{tpu_custom_call.1} parent=43 // pred_region
          %p287 = scmp.lt.s32.totalorder %s19, 1
          %s288 = scalar_select %p287, %s19, 1
          %s289 = smul.addr %s288, 3
          %s290 = smul.addr %s289, 8
          %s291 = scalar_lea.vmem %s0, %s290
        $region48: #{tpu_custom_call.1} parent=43 // pred_fallthru
          _
      $region44: #{tpu_custom_call.1} parent=5 // pred_fallthru
        _
      %p292 = scmp.le.s32.totalorder 1, %s19
      %p293 = scmp.lt.s32.totalorder %s19, 3
      %p294 = pnand %p292, %p293
      %p295 = pneg %p294
      // Predicated region
      $region49: #{tpu_custom_call.1} parent=5 // pred_check
        _
      $region50: #{tpu_custom_call.1} parent=5 // pred_check_branch
        %297 = sbr.rel (%p294) target = $region52
      $region51: #{tpu_custom_call.1} parent=5 // pred_region
        %s298 = ssub.s32 %s19, 1
        %p299 = scmp.lt.s32.totalorder %s24, 1
        %s300 = scalar_select %p299, %s24, 1
        %s301 = smul.addr %s300, 3
        %s302 = smul.addr %s301, 8
        %s303 = scalar_lea.vmem %s0, %s302
        %p304 = pneg %p45
        %p305 = pneg %p42
        %p306 = pneg %p66
        %p307 = pneg %p63
        %p308 = pneg %p87
        %p309 = pneg %p84
        %p310 = pneg %p108
        %p311 = pneg %p105
        %p312 = pneg %p129
        %p313 = pneg %p126
        %p314 = pneg %p150
        %p315 = pneg %p147
        %p316 = pneg %p171
        %p317 = pneg %p168
        %p318 = pneg %p192
        %p319 = pneg %p189
        %p320 = pneg %p218
        %p321 = pneg %p215
        %p322 = scmp.lt.s32.totalorder %s24, 1
        %s323 = scalar_select %p322, %s24, 1
        %s324 = smul.addr %s323, 3
        %s325 = smul.addr %s324, 8
        %s326 = scalar_lea.vmem %s8, %s325
        %p327 = pneg %p244
        %p328 = pneg %p241
        %s329 = sand.u32 %s231, 1
        %s330 = scalar_lea.sflag [#allocation3], %s329
        %s331 = sand.u32 %s231, 1
        %s332 = scalar_lea.vmem [#allocation2], %s331
        %p333 = scmp.lt.s32.totalorder %s24, 1
        %s334 = scalar_select %p333, %s24, 1
        %s335 = smul.addr %s334, 3
        %s336 = smul.addr %s335, 8
        %s337 = scalar_lea.vmem %s0, %s336
        %p338 = scmp.lt.s32.totalorder %s24, 1
        %s339 = scalar_select %p338, %s24, 1
        %s340 = smul.addr %s339, 3
        %s341 = smul.addr %s340, 8
        %s342 = scalar_lea.vmem %s8, %s341
        %v343 = vld [vmem:[%s337] sm:$0xff]
        %v344 = vld [vmem:[%s337 + $0x8] sm:$0xff]
        %v345 = vld [vmem:[%s337 + $0x10] sm:$0x1]
        %v346 = vld [vmem:[%s1] sm:$0xff]
        %v347 = vld [vmem:[%s1 + $0x8] sm:$0xff]
        %v348 = vld [vmem:[%s1 + $0x10] sm:$0xff]
        %v349 = vld [vmem:[%s1 + $0x18] sm:$0xff]
        %v350 = vld [vmem:[%s2] sm:$0x1]
        %v352 = vlaneseq
        %v353 = vshrl.u32 %v352, 7
        %v354 = vsub.s32 0, %v353
        %v355 = vrot.slane %v350, %v354
        %vm357 = vcmask 261120
        %v359 = vsel %vm357, %v343, 0
        %v362 = vsel %vm357, %v344, 0
        %v365 = vsel %vm357, %v345, 0
        %367 = vmatprep.subr.mxu0 0.0
        %368 = vmatpush1.msra.mxu0 0.0
        %369 = vmatprep.subr.mxu0 0.0
        %370 = vmatpush1.msra.mxu0 0.0
        %371 = vmatprep.subr.mxu0 0.0
        %372 = vmatpush1.msra.mxu0 0.0
        %373 = vmatprep.subr.mxu0 0.0
        %374 = vmatpush1.msra.mxu0 0.0
        %375 = vmatprep.subr.mxu0 0.0
        %376 = vmatpush1.msra.mxu0 0.0
        %377 = vmatprep.subr.mxu0 0.0
        %378 = vmatpush1.msra.mxu0 0.0
        %379 = vmatprep.subr.mxu0 0.0
        %380 = vmatpush1.msra.mxu0 0.0
        %381 = vmatprep.subr.mxu0 0.0
        %382 = vmatpush1.msra.mxu0 0.0
        %383 = vmatprep.subr.mxu0 0.0
        %384 = vmatpush1.msra.mxu0 0.0
        %385 = vmatprep.subr.mxu0 0.0
        %386 = vmatpush1.msra.mxu0 0.0
        %387 = vmatprep.subr.mxu0 0.0
        %388 = vmatpush1.msra.mxu0 0.0
        %389 = vmatprep.subr.mxu0 0.0
        %390 = vmatpush1.msra.mxu0 0.0
        %391 = vmatprep.subr.mxu0 0.0
        %392 = vmatpush1.msra.mxu0 %v349
        %393 = vmatprep.subr.mxu0 0.0
        %394 = vmatpush1.msra.mxu0 %v348
        %395 = vmatprep.subr.mxu0 0.0
        %396 = vmatpush1.msra.mxu0 %v347
        %397 = vmatprep.subr.mxu0 0.0
        %398 = vmatpush1.msra.mxu0 %v346
        %399 = vmatprep.subr.mxu0 0.0
        %400 = vmatpush2.msra.mxu0 0.0
        %401 = vmatprep.subr.mxu0 0.0
        %402 = vmatpush2.msra.mxu0 0.0
        %403 = vmatprep.subr.mxu0 0.0
        %404 = vmatpush2.msra.mxu0 0.0
        %405 = vmatprep.subr.mxu0 0.0
        %406 = vmatpush2.msra.mxu0 0.0
        %407 = vmatprep.subr.mxu0 0.0
        %408 = vmatpush2.msra.mxu0 0.0
        %409 = vmatprep.subr.mxu0 0.0
        %410 = vmatpush2.msra.mxu0 0.0
        %411 = vmatprep.subr.mxu0 0.0
        %412 = vmatpush2.msra.mxu0 0.0
        %413 = vmatprep.subr.mxu0 0.0
        %414 = vmatpush2.msra.mxu0 0.0
        %415 = vmatprep.subr.mxu0 0.0
        %416 = vmatpush2.msra.mxu0 0.0
        %417 = vmatprep.subr.mxu0 0.0
        %418 = vmatpush2.msra.mxu0 0.0
        %419 = vmatprep.subr.mxu0 0.0
        %420 = vmatpush2.msra.mxu0 0.0
        %421 = vmatprep.subr.mxu0 0.0
        %422 = vmatpush2.msra.mxu0 0.0
        %423 = vmatprep.subr.mxu0 0.0
        %424 = vmatpush2.msra.mxu0 0.0
        %425 = vmatprep.subr.mxu0 0.0
        %426 = vmatpush2.msra.mxu0 0.0
        %427 = vmatprep.subr.mxu0 0.0
        %428 = vmatpush2.msra.mxu0 0.0
        %429 = vmatprep.subr.mxu0 0.0
        %430 = vmatpush2.msra.mxu0 0.0
        %431 = vmatprep.mubr.f32.mxu0 0.0
        %432 = vmatmul.mubr.f32.gmra.mxu0 %v359
        %v433 = vpop.f32.mrf.mxu0
        %v434 = vadd.f32 %v355, %v433
        %v435 = vpop.f32.mrf.mxu0
        %436 = vmatprep.mubr.f32.mxu0 0.0
        %437 = vmatmul.mubr.f32.gmra.mxu0 %v362
        %v438 = vpop.f32.mrf.mxu0
        %v439 = vadd.f32 %v355, %v438
        %v440 = vpop.f32.mrf.mxu0
        %441 = vmatprep.mubr.f32.mxu0 0.0
        %442 = vmatmul.mubr.f32.gmra.mxu0 %v365
        %v443 = vpop.f32.mrf.mxu0
        %v444 = vadd.f32 %v355, %v443
        %v445 = vpop.f32.mrf.mxu0
        %446 = vdwg.mxu0
        %vm450 = vcmask 1040384
        %v451 = vrot.slane %v434, 7
        %v452 = vrot.slane %v439, 7
        %v453 = vsel %vm450, %v451, %v452
        %v454 = vrot.slane %v444, 7
        %v455 = vsel %vm450, %v452, %v454
        %vm459 = vcmask 1041408
        %v460 = vrot.slane %v434, 6
        %v461 = vrot.slane %v439, 6
        %v462 = vsel %vm459, %v460, %v461
        %v463 = vrot.slane %v444, 6
        %v464 = vsel %vm459, %v461, %v463
        %vm468 = vcmask 1042432
        %v469 = vrot.slane %v434, 5
        %v470 = vrot.slane %v439, 5
        %v471 = vsel %vm468, %v469, %v470
        %v472 = vrot.slane %v444, 5
        %v473 = vsel %vm468, %v470, %v472
        %v477 = vsel %vm450, %v444, %v451
        %v478 = vsel %vm459, %v455, %v460
        %v479 = vsel %vm468, %v464, %v469
        %v480 = vld [vmem:[%s5] sm:$0xff]
        %v481 = vld [vmem:[%s5 + $0x8] sm:$0xff]
        %v482 = vld [vmem:[%s5 + $0x10] sm:$0xff]
        %v483 = vld [vmem:[%s5 + $0x18] sm:$0xff]
        %v484 = vld [vmem:[%s5 + $0x20] sm:$0xff]
        %v485 = vld [vmem:[%s5 + $0x28] sm:$0xff]
        %v486 = vld [vmem:[%s5 + $0x30] sm:$0xff]
        %v487 = vld [vmem:[%s5 + $0x38] sm:$0xff]
        %v488 = vld [vmem:[%s5 + $0x40] sm:$0xf]
        %v489 = vmul.f32 %v434, %v480
        %v490 = vmul.f32 %v439, %v481
        %v491 = vmul.f32 %v477, %v482
        %v492 = vmul.f32 %v453, %v483
        %v493 = vmul.f32 %v478, %v484
        %v494 = vmul.f32 %v462, %v485
        %v495 = vmul.f32 %v479, %v486
        %v496 = vmul.f32 %v471, %v487
        %v497 = vmul.f32 %v473, %v488
        %v498 = vld [vmem:[%s6] sm:$0xff]
        %v499 = vld [vmem:[%s6 + $0x8] sm:$0xff]
        %v500 = vld [vmem:[%s6 + $0x10] sm:$0xff]
        %v501 = vld [vmem:[%s6 + $0x18] sm:$0xff]
        %v502 = vld [vmem:[%s6 + $0x20] sm:$0xff]
        %v503 = vld [vmem:[%s6 + $0x28] sm:$0xff]
        %v504 = vld [vmem:[%s6 + $0x30] sm:$0xff]
        %v505 = vld [vmem:[%s6 + $0x38] sm:$0xff]
        %v506 = vld [vmem:[%s6 + $0x40] sm:$0xf]
        %516 = vrot.lane.b32.xlu0 %v498, 64
        %v517 = vpop.permute.xlu0 %516
        %518 = vrot.lane.b32.xlu0 %v499, 64
        %v519 = vpop.permute.xlu0 %518
        %520 = vrot.lane.b32.xlu0 %v500, 64
        %v521 = vpop.permute.xlu0 %520
        %522 = vrot.lane.b32.xlu0 %v501, 64
        %v523 = vpop.permute.xlu0 %522
        %524 = vrot.lane.b32.xlu0 %v502, 64
        %v525 = vpop.permute.xlu0 %524
        %526 = vrot.lane.b32.xlu0 %v503, 64
        %v527 = vpop.permute.xlu0 %526
        %528 = vrot.lane.b32.xlu0 %v504, 64
        %v529 = vpop.permute.xlu0 %528
        %530 = vrot.lane.b32.xlu0 %v505, 64
        %v531 = vpop.permute.xlu0 %530
        %532 = vrot.lane.b32.xlu0 %v506, 64
        %v533 = vpop.permute.xlu0 %532
        %v543 = vmul.f32 %v434, %v517
        %v544 = vmul.f32 %v439, %v519
        %v545 = vmul.f32 %v477, %v521
        %v546 = vmul.f32 %v453, %v523
        %v547 = vmul.f32 %v478, %v525
        %v548 = vmul.f32 %v462, %v527
        %v549 = vmul.f32 %v479, %v529
        %v550 = vmul.f32 %v471, %v531
        %v551 = vmul.f32 %v473, %v533
        %v552 = vld [vmem:[%s7] sm:$0xff]
        %v553 = vld [vmem:[%s7 + $0x8] sm:$0xff]
        %v554 = vld [vmem:[%s7 + $0x10] sm:$0xff]
        %v555 = vld [vmem:[%s7 + $0x18] sm:$0xff]
        %v556 = vld [vmem:[%s7 + $0x20] sm:$0xff]
        %v557 = vld [vmem:[%s7 + $0x28] sm:$0xff]
        %v558 = vld [vmem:[%s7 + $0x30] sm:$0xff]
        %v559 = vld [vmem:[%s7 + $0x38] sm:$0xff]
        %v560 = vld [vmem:[%s7 + $0x40] sm:$0xf]
        %564 = vrot.lane.b32.xlu0 %v434, 96
        %v565 = vpop.permute.xlu0 %564
        %566 = vrot.lane.b32.xlu0 %v439, 96
        %v567 = vpop.permute.xlu0 %566
        %568 = vrot.lane.b32.xlu0 %v477, 96
        %v569 = vpop.permute.xlu0 %568
        %570 = vrot.lane.b32.xlu0 %v453, 96
        %v571 = vpop.permute.xlu0 %570
        %572 = vrot.lane.b32.xlu0 %v478, 96
        %v573 = vpop.permute.xlu0 %572
        %574 = vrot.lane.b32.xlu0 %v462, 96
        %v575 = vpop.permute.xlu0 %574
        %576 = vrot.lane.b32.xlu0 %v479, 96
        %v577 = vpop.permute.xlu0 %576
        %578 = vrot.lane.b32.xlu0 %v471, 96
        %v579 = vpop.permute.xlu0 %578
        %580 = vrot.lane.b32.xlu0 %v473, 96
        %v581 = vpop.permute.xlu0 %580
        %v583 = vsel %vm357, %v489, 0
        %v586 = vsel %vm357, %v490, 0
        %v589 = vsel %vm357, %v491, 0
        %v592 = vsel %vm357, %v492, 0
        %v595 = vsel %vm357, %v493, 0
        %v598 = vsel %vm357, %v494, 0
        %v601 = vsel %vm357, %v495, 0
        %v604 = vsel %vm357, %v496, 0
        %v607 = vsel %vm357, %v497, 0
        %v609 = vsel %vm357, %v565, 0
        %v611 = vsel %vm357, %v567, 0
        %v613 = vsel %vm357, %v569, 0
        %v615 = vsel %vm357, %v571, 0
        %v617 = vsel %vm357, %v573, 0
        %v619 = vsel %vm357, %v575, 0
        %v621 = vsel %vm357, %v577, 0
        %v623 = vsel %vm357, %v579, 0
        %v625 = vsel %vm357, %v581, 0
        %627 = vmatprep.subr.mxu0 0.0
        %628 = vmatpush1.xpose.msra.mxu0 0.0
        %629 = vmatprep.subr.mxu0 0.0
        %630 = vmatpush1.xpose.msra.mxu0 0.0
        %631 = vmatprep.subr.mxu0 0.0
        %632 = vmatpush1.xpose.msra.mxu0 0.0
        %633 = vmatprep.subr.mxu0 0.0
        %634 = vmatpush1.xpose.msra.mxu0 0.0
        %635 = vmatprep.subr.mxu0 0.0
        %636 = vmatpush1.xpose.msra.mxu0 0.0
        %637 = vmatprep.subr.mxu0 0.0
        %638 = vmatpush1.xpose.msra.mxu0 0.0
        %639 = vmatprep.subr.mxu0 0.0
        %640 = vmatpush1.xpose.msra.mxu0 0.0
        %641 = vmatprep.subr.mxu0 0.0
        %642 = vmatpush1.xpose.msra.mxu0 %v625
        %643 = vmatprep.subr.mxu0 0.0
        %644 = vmatpush1.xpose.msra.mxu0 %v623
        %645 = vmatprep.subr.mxu0 0.0
        %646 = vmatpush1.xpose.msra.mxu0 %v621
        %647 = vmatprep.subr.mxu0 0.0
        %648 = vmatpush1.xpose.msra.mxu0 %v619
        %649 = vmatprep.subr.mxu0 0.0
        %650 = vmatpush1.xpose.msra.mxu0 %v617
        %651 = vmatprep.subr.mxu0 0.0
        %652 = vmatpush1.xpose.msra.mxu0 %v615
        %653 = vmatprep.subr.mxu0 0.0
        %654 = vmatpush1.xpose.msra.mxu0 %v613
        %655 = vmatprep.subr.mxu0 0.0
        %656 = vmatpush1.xpose.msra.mxu0 %v611
        %657 = vmatprep.subr.mxu0 0.0
        %658 = vmatpush1.xpose.msra.mxu0 %v609
        %659 = vmatprep.subr.mxu0 0.0
        %660 = vmatpush2.xpose.msra.mxu0 0.0
        %661 = vmatprep.subr.mxu0 0.0
        %662 = vmatpush2.xpose.msra.mxu0 0.0
        %663 = vmatprep.subr.mxu0 0.0
        %664 = vmatpush2.xpose.msra.mxu0 0.0
        %665 = vmatprep.subr.mxu0 0.0
        %666 = vmatpush2.xpose.msra.mxu0 0.0
        %667 = vmatprep.subr.mxu0 0.0
        %668 = vmatpush2.xpose.msra.mxu0 0.0
        %669 = vmatprep.subr.mxu0 0.0
        %670 = vmatpush2.xpose.msra.mxu0 0.0
        %671 = vmatprep.subr.mxu0 0.0
        %672 = vmatpush2.xpose.msra.mxu0 0.0
        %673 = vmatprep.subr.mxu0 0.0
        %674 = vmatpush2.xpose.msra.mxu0 0.0
        %675 = vmatprep.subr.mxu0 0.0
        %676 = vmatpush2.xpose.msra.mxu0 0.0
        %677 = vmatprep.subr.mxu0 0.0
        %678 = vmatpush2.xpose.msra.mxu0 0.0
        %679 = vmatprep.subr.mxu0 0.0
        %680 = vmatpush2.xpose.msra.mxu0 0.0
        %681 = vmatprep.subr.mxu0 0.0
        %682 = vmatpush2.xpose.msra.mxu0 0.0
        %683 = vmatprep.subr.mxu0 0.0
        %684 = vmatpush2.xpose.msra.mxu0 0.0
        %685 = vmatprep.subr.mxu0 0.0
        %686 = vmatpush2.xpose.msra.mxu0 0.0
        %687 = vmatprep.subr.mxu0 0.0
        %688 = vmatpush2.xpose.msra.mxu0 0.0
        %689 = vmatprep.subr.mxu0 0.0
        %690 = vmatpush2.xpose.msra.mxu0 0.0
        %691 = vmatprep.mubr.f32.mxu0 0.0
        %692 = vmatmul.mubr.f32.gmra.mxu0 %v583
        %v693 = vpop.f32.mrf.mxu0
        %v694 = vadd.f32 %v552, %v693
        %v695 = vpop.f32.mrf.mxu0
        %696 = vmatprep.mubr.f32.mxu0 0.0
        %697 = vmatmul.mubr.f32.gmra.mxu0 %v586
        %v698 = vpop.f32.mrf.mxu0
        %v699 = vadd.f32 %v553, %v698
        %v700 = vpop.f32.mrf.mxu0
        %701 = vmatprep.mubr.f32.mxu0 0.0
        %702 = vmatmul.mubr.f32.gmra.mxu0 %v589
        %v703 = vpop.f32.mrf.mxu0
        %v704 = vadd.f32 %v554, %v703
        %v705 = vpop.f32.mrf.mxu0
        %706 = vmatprep.mubr.f32.mxu0 0.0
        %707 = vmatmul.mubr.f32.gmra.mxu0 %v592
        %v708 = vpop.f32.mrf.mxu0
        %v709 = vadd.f32 %v555, %v708
        %v710 = vpop.f32.mrf.mxu0
        %711 = vmatprep.mubr.f32.mxu0 0.0
        %712 = vmatmul.mubr.f32.gmra.mxu0 %v595
        %v713 = vpop.f32.mrf.mxu0
        %v714 = vadd.f32 %v556, %v713
        %v715 = vpop.f32.mrf.mxu0
        %716 = vmatprep.mubr.f32.mxu0 0.0
        %717 = vmatmul.mubr.f32.gmra.mxu0 %v598
        %v718 = vpop.f32.mrf.mxu0
        %v719 = vadd.f32 %v557, %v718
        %v720 = vpop.f32.mrf.mxu0
        %721 = vmatprep.mubr.f32.mxu0 0.0
        %722 = vmatmul.mubr.f32.gmra.mxu0 %v601
        %v723 = vpop.f32.mrf.mxu0
        %v724 = vadd.f32 %v558, %v723
        %v725 = vpop.f32.mrf.mxu0
        %726 = vmatprep.mubr.f32.mxu0 0.0
        %727 = vmatmul.mubr.f32.gmra.mxu0 %v604
        %v728 = vpop.f32.mrf.mxu0
        %v729 = vadd.f32 %v559, %v728
        %v730 = vpop.f32.mrf.mxu0
        %731 = vmatprep.mubr.f32.mxu0 0.0
        %732 = vmatmul.mubr.f32.gmra.mxu0 %v607
        %v733 = vpop.f32.mrf.mxu0
        %v734 = vadd.f32 %v560, %v733
        %v735 = vpop.f32.mrf.mxu0
        %736 = vdwg.mxu0
        %vm737 = vcmask 556032
        %v738 = vsel %vm737, %v694, -inf
        %739 = vmax.xlane.f32.xlu0 %v738
        %v740 = vpop.xlane.xlu0 %739
        %v741 = vsel %vm737, %v699, -inf
        %742 = vmax.xlane.f32.xlu0 %v741
        %v743 = vpop.xlane.xlu0 %742
        %v744 = vsel %vm737, %v704, -inf
        %745 = vmax.xlane.f32.xlu0 %v744
        %v746 = vpop.xlane.xlu0 %745
        %v747 = vsel %vm737, %v709, -inf
        %748 = vmax.xlane.f32.xlu0 %v747
        %v749 = vpop.xlane.xlu0 %748
        %v750 = vsel %vm737, %v714, -inf
        %751 = vmax.xlane.f32.xlu0 %v750
        %v752 = vpop.xlane.xlu0 %751
        %v753 = vsel %vm737, %v719, -inf
        %754 = vmax.xlane.f32.xlu0 %v753
        %v755 = vpop.xlane.xlu0 %754
        %v756 = vsel %vm737, %v724, -inf
        %757 = vmax.xlane.f32.xlu0 %v756
        %v758 = vpop.xlane.xlu0 %757
        %v759 = vsel %vm737, %v729, -inf
        %760 = vmax.xlane.f32.xlu0 %v759
        %v761 = vpop.xlane.xlu0 %760
        %vm762 = vcmask 551936
        %v763 = vsel %vm762, %v734, -inf
        %764 = vmax.xlane.f32.xlu0 %v763
        %v765 = vpop.xlane.xlu0 %764
        %v766 = vsub.f32 %v694, %v740
        %v767 = vsub.f32 %v699, %v743
        %v768 = vsub.f32 %v704, %v746
        %v769 = vsub.f32 %v709, %v749
        %v770 = vsub.f32 %v714, %v752
        %v771 = vsub.f32 %v719, %v755
        %v772 = vsub.f32 %v724, %v758
        %v773 = vsub.f32 %v729, %v761
        %v774 = vsub.f32 %v734, %v765
        %v775 = vmul.f32 %v766, 1.442695
        %v776 = vpow.pop %v775
        %v777 = vmul.f32 %v767, 1.442695
        %v778 = vpow.pop %v777
        %v779 = vmul.f32 %v768, 1.442695
        %v780 = vpow.pop %v779
        %v781 = vmul.f32 %v769, 1.442695
        %v782 = vpow.pop %v781
        %v783 = vmul.f32 %v770, 1.442695
        %v784 = vpow.pop %v783
        %v785 = vmul.f32 %v771, 1.442695
        %v786 = vpow.pop %v785
        %v787 = vmul.f32 %v772, 1.442695
        %v788 = vpow.pop %v787
        %v789 = vmul.f32 %v773, 1.442695
        %v790 = vpow.pop %v789
        %v791 = vmul.f32 %v774, 1.442695
        %v792 = vpow.pop %v791
        %v793 = vsel %vm737, %v776, 0.0
        %794 = vadd.xlane.f32.xlu0 %v793
        %v795 = vpop.xlane.xlu0 %794
        %v796 = vsel %vm737, %v778, 0.0
        %797 = vadd.xlane.f32.xlu0 %v796
        %v798 = vpop.xlane.xlu0 %797
        %v799 = vsel %vm737, %v780, 0.0
        %800 = vadd.xlane.f32.xlu0 %v799
        %v801 = vpop.xlane.xlu0 %800
        %v802 = vsel %vm737, %v782, 0.0
        %803 = vadd.xlane.f32.xlu0 %v802
        %v804 = vpop.xlane.xlu0 %803
        %v805 = vsel %vm737, %v784, 0.0
        %806 = vadd.xlane.f32.xlu0 %v805
        %v807 = vpop.xlane.xlu0 %806
        %v808 = vsel %vm737, %v786, 0.0
        %809 = vadd.xlane.f32.xlu0 %v808
        %v810 = vpop.xlane.xlu0 %809
        %v811 = vsel %vm737, %v788, 0.0
        %812 = vadd.xlane.f32.xlu0 %v811
        %v813 = vpop.xlane.xlu0 %812
        %v814 = vsel %vm737, %v790, 0.0
        %815 = vadd.xlane.f32.xlu0 %v814
        %v816 = vpop.xlane.xlu0 %815
        %v817 = vsel %vm762, %v792, 0.0
        %818 = vadd.xlane.f32.xlu0 %v817
        %v819 = vpop.xlane.xlu0 %818
        %v820 = vrcp.pop %v795
        %v821 = vrcp.pop %v798
        %v822 = vrcp.pop %v801
        %v823 = vrcp.pop %v804
        %v824 = vrcp.pop %v807
        %v825 = vrcp.pop %v810
        %v826 = vrcp.pop %v813
        %v827 = vrcp.pop %v816
        %v828 = vrcp.pop %v819
        %v829 = vmul.f32 %v776, %v820
        %v830 = vmul.f32 %v778, %v821
        %v831 = vmul.f32 %v780, %v822
        %v832 = vmul.f32 %v782, %v823
        %v833 = vmul.f32 %v784, %v824
        %v834 = vmul.f32 %v786, %v825
        %v835 = vmul.f32 %v788, %v826
        %v836 = vmul.f32 %v790, %v827
        %v837 = vmul.f32 %v792, %v828
        %847 = vrot.lane.b32.xlu0 %v543, 64
        %v848 = vpop.permute.xlu0 %847
        %849 = vrot.lane.b32.xlu0 %v544, 64
        %v850 = vpop.permute.xlu0 %849
        %851 = vrot.lane.b32.xlu0 %v545, 64
        %v852 = vpop.permute.xlu0 %851
        %853 = vrot.lane.b32.xlu0 %v546, 64
        %v854 = vpop.permute.xlu0 %853
        %855 = vrot.lane.b32.xlu0 %v547, 64
        %v856 = vpop.permute.xlu0 %855
        %857 = vrot.lane.b32.xlu0 %v548, 64
        %v858 = vpop.permute.xlu0 %857
        %859 = vrot.lane.b32.xlu0 %v549, 64
        %v860 = vpop.permute.xlu0 %859
        %861 = vrot.lane.b32.xlu0 %v550, 64
        %v862 = vpop.permute.xlu0 %861
        %863 = vrot.lane.b32.xlu0 %v551, 64
        %v864 = vpop.permute.xlu0 %863
        %v874 = vsel %vm737, %v829, 0
        %v877 = vsel %vm737, %v830, 0
        %v880 = vsel %vm737, %v831, 0
        %v883 = vsel %vm737, %v832, 0
        %v886 = vsel %vm737, %v833, 0
        %v889 = vsel %vm737, %v834, 0
        %v892 = vsel %vm737, %v835, 0
        %v895 = vsel %vm737, %v836, 0
        %v898 = vsel %vm737, %v837, 0
        %vm900 = vcmask 1043456
        %v901 = vsel %vm900, %v864, 0
        %903 = vmatprep.subr.mxu0 0.0
        %904 = vmatpush1.msra.mxu0 0.0
        %905 = vmatprep.subr.mxu0 0.0
        %906 = vmatpush1.msra.mxu0 0.0
        %907 = vmatprep.subr.mxu0 0.0
        %908 = vmatpush1.msra.mxu0 0.0
        %909 = vmatprep.subr.mxu0 0.0
        %910 = vmatpush1.msra.mxu0 0.0
        %911 = vmatprep.subr.mxu0 0.0
        %912 = vmatpush1.msra.mxu0 0.0
        %913 = vmatprep.subr.mxu0 0.0
        %914 = vmatpush1.msra.mxu0 0.0
        %915 = vmatprep.subr.mxu0 0.0
        %916 = vmatpush1.msra.mxu0 0.0
        %917 = vmatprep.subr.mxu0 0.0
        %918 = vmatpush1.msra.mxu0 %v901
        %919 = vmatprep.subr.mxu0 0.0
        %920 = vmatpush1.msra.mxu0 %v862
        %921 = vmatprep.subr.mxu0 0.0
        %922 = vmatpush1.msra.mxu0 %v860
        %923 = vmatprep.subr.mxu0 0.0
        %924 = vmatpush1.msra.mxu0 %v858
        %925 = vmatprep.subr.mxu0 0.0
        %926 = vmatpush1.msra.mxu0 %v856
        %927 = vmatprep.subr.mxu0 0.0
        %928 = vmatpush1.msra.mxu0 %v854
        %929 = vmatprep.subr.mxu0 0.0
        %930 = vmatpush1.msra.mxu0 %v852
        %931 = vmatprep.subr.mxu0 0.0
        %932 = vmatpush1.msra.mxu0 %v850
        %933 = vmatprep.subr.mxu0 0.0
        %934 = vmatpush1.msra.mxu0 %v848
        %935 = vmatprep.subr.mxu0 0.0
        %936 = vmatpush2.msra.mxu0 0.0
        %937 = vmatprep.subr.mxu0 0.0
        %938 = vmatpush2.msra.mxu0 0.0
        %939 = vmatprep.subr.mxu0 0.0
        %940 = vmatpush2.msra.mxu0 0.0
        %941 = vmatprep.subr.mxu0 0.0
        %942 = vmatpush2.msra.mxu0 0.0
        %943 = vmatprep.subr.mxu0 0.0
        %944 = vmatpush2.msra.mxu0 0.0
        %945 = vmatprep.subr.mxu0 0.0
        %946 = vmatpush2.msra.mxu0 0.0
        %947 = vmatprep.subr.mxu0 0.0
        %948 = vmatpush2.msra.mxu0 0.0
        %949 = vmatprep.subr.mxu0 0.0
        %950 = vmatpush2.msra.mxu0 0.0
        %951 = vmatprep.subr.mxu0 0.0
        %952 = vmatpush2.msra.mxu0 0.0
        %953 = vmatprep.subr.mxu0 0.0
        %954 = vmatpush2.msra.mxu0 0.0
        %955 = vmatprep.subr.mxu0 0.0
        %956 = vmatpush2.msra.mxu0 0.0
        %957 = vmatprep.subr.mxu0 0.0
        %958 = vmatpush2.msra.mxu0 0.0
        %959 = vmatprep.subr.mxu0 0.0
        %960 = vmatpush2.msra.mxu0 0.0
        %961 = vmatprep.subr.mxu0 0.0
        %962 = vmatpush2.msra.mxu0 0.0
        %963 = vmatprep.subr.mxu0 0.0
        %964 = vmatpush2.msra.mxu0 0.0
        %965 = vmatprep.subr.mxu0 0.0
        %966 = vmatpush2.msra.mxu0 0.0
        %967 = vmatprep.mubr.f32.mxu0 0.0
        %968 = vmatmul.mubr.f32.gmra.mxu0 %v874
        %v969 = vpop.f32.mrf.mxu0
        %v970 = vadd.f32 0.0, %v969
        %v971 = vpop.f32.mrf.mxu0
        %972 = vmatprep.mubr.f32.mxu0 0.0
        %973 = vmatmul.mubr.f32.gmra.mxu0 %v877
        %v974 = vpop.f32.mrf.mxu0
        %v975 = vadd.f32 0.0, %v974
        %v976 = vpop.f32.mrf.mxu0
        %977 = vmatprep.mubr.f32.mxu0 0.0
        %978 = vmatmul.mubr.f32.gmra.mxu0 %v880
        %v979 = vpop.f32.mrf.mxu0
        %v980 = vadd.f32 0.0, %v979
        %v981 = vpop.f32.mrf.mxu0
        %982 = vmatprep.mubr.f32.mxu0 0.0
        %983 = vmatmul.mubr.f32.gmra.mxu0 %v883
        %v984 = vpop.f32.mrf.mxu0
        %v985 = vadd.f32 0.0, %v984
        %v986 = vpop.f32.mrf.mxu0
        %987 = vmatprep.mubr.f32.mxu0 0.0
        %988 = vmatmul.mubr.f32.gmra.mxu0 %v886
        %v989 = vpop.f32.mrf.mxu0
        %v990 = vadd.f32 0.0, %v989
        %v991 = vpop.f32.mrf.mxu0
        %992 = vmatprep.mubr.f32.mxu0 0.0
        %993 = vmatmul.mubr.f32.gmra.mxu0 %v889
        %v994 = vpop.f32.mrf.mxu0
        %v995 = vadd.f32 0.0, %v994
        %v996 = vpop.f32.mrf.mxu0
        %997 = vmatprep.mubr.f32.mxu0 0.0
        %998 = vmatmul.mubr.f32.gmra.mxu0 %v892
        %v999 = vpop.f32.mrf.mxu0
        %v1000 = vadd.f32 0.0, %v999
        %v1001 = vpop.f32.mrf.mxu0
        %1002 = vmatprep.mubr.f32.mxu0 0.0
        %1003 = vmatmul.mubr.f32.gmra.mxu0 %v895
        %v1004 = vpop.f32.mrf.mxu0
        %v1005 = vadd.f32 0.0, %v1004
        %v1006 = vpop.f32.mrf.mxu0
        %1007 = vmatprep.mubr.f32.mxu0 0.0
        %1008 = vmatmul.mubr.f32.gmra.mxu0 %v898
        %v1009 = vpop.f32.mrf.mxu0
        %v1010 = vadd.f32 0.0, %v1009
        %v1011 = vpop.f32.mrf.mxu0
        %1012 = vdwg.mxu0
        %vm1016 = vcmask 1046528
        %v1017 = vrot.slane %v980, 1
        %v1018 = vrot.slane %v985, 1
        %v1019 = vsel %vm1016, %v1017, %v1018
        %v1020 = vrot.slane %v990, 1
        %v1021 = vsel %vm1016, %v1018, %v1020
        %v1025 = vadd.f32 %v970, %v1019
        %v1026 = vadd.f32 %v975, %v1021
        %v1027 = vadd.f32 %v980, %v1020
        %vm1030 = vcmask 1045504
        %v1031 = vrot.slane %v990, 2
        %v1032 = vrot.slane %v995, 2
        %v1033 = vsel %vm1030, %v1031, %v1032
        %v1034 = vrot.slane %v1000, 2
        %v1035 = vsel %vm1030, %v1032, %v1034
        %v1039 = vadd.f32 %v1025, %v1033
        %v1040 = vadd.f32 %v1026, %v1035
        %v1041 = vadd.f32 %v1027, %v1034
        %vm1044 = vcmask 1044480
        %v1045 = vrot.slane %v1000, 3
        %v1046 = vrot.slane %v1005, 3
        %v1047 = vsel %vm1044, %v1045, %v1046
        %v1048 = vrot.slane %v1010, 3
        %v1049 = vsel %vm1044, %v1046, %v1048
        %v1053 = vadd.f32 %v1039, %v1047
        %v1054 = vadd.f32 %v1040, %v1049
        %v1055 = vadd.f32 %v1041, %v1048
        %v1056 = vrot.slane %v831, 1
        %v1058 = vadd.f32 %v829, %v1056
        %v1059 = vrot.slane %v833, 2
        %v1061 = vadd.f32 %v1058, %v1059
        %v1062 = vrot.slane %v835, 3
        %v1064 = vadd.f32 %v1061, %v1062
        %1066 = vrot.lane.b32.xlu0 %v1064, 111
        %v1067 = vpop.permute.xlu0 %1066
        %v1069 = vadd.f32 %v1064, %v1067
        %1070 = vrot.lane.b32.xlu0 %v1064, 94
        %v1071 = vpop.permute.xlu0 %1070
        %v1073 = vadd.f32 %v1069, %v1071
        %1074 = vrot.lane.b32.xlu0 %v1064, 77
        %v1075 = vpop.permute.xlu0 %1074
        %v1077 = vadd.f32 %v1073, %v1075
        %v1078 = vmul.f32 %v1077, 0.25
        %vm1079 = vcmask 131072
        %1080 = vst.msk [vmem:[%s332] sm:$0x1] %vm1079, %v1078
        %v1081 = vld [vmem:[%s3] sm:$0xff]
        %v1082 = vld [vmem:[%s3 + $0x8] sm:$0xff]
        %v1083 = vld [vmem:[%s3 + $0x10] sm:$0xff]
        %v1084 = vld [vmem:[%s3 + $0x18] sm:$0xff]
        %v1085 = vld [vmem:[%s4] sm:$0x1]
        %v1087 = vlaneseq
        %v1088 = vshrl.u32 %v1087, 7
        %v1089 = vsub.s32 0, %v1088
        %v1090 = vrot.slane %v1085, %v1089
        %v1093 = vsel %vm357, %v1053, 0
        %v1096 = vsel %vm357, %v1054, 0
        %v1099 = vsel %vm357, %v1055, 0
        %1101 = vmatprep.subr.mxu0 0.0
        %1102 = vmatpush1.msra.mxu0 0.0
        %1103 = vmatprep.subr.mxu0 0.0
        %1104 = vmatpush1.msra.mxu0 0.0
        %1105 = vmatprep.subr.mxu0 0.0
        %1106 = vmatpush1.msra.mxu0 0.0
        %1107 = vmatprep.subr.mxu0 0.0
        %1108 = vmatpush1.msra.mxu0 0.0
        %1109 = vmatprep.subr.mxu0 0.0
        %1110 = vmatpush1.msra.mxu0 0.0
        %1111 = vmatprep.subr.mxu0 0.0
        %1112 = vmatpush1.msra.mxu0 0.0
        %1113 = vmatprep.subr.mxu0 0.0
        %1114 = vmatpush1.msra.mxu0 0.0
        %1115 = vmatprep.subr.mxu0 0.0
        %1116 = vmatpush1.msra.mxu0 0.0
        %1117 = vmatprep.subr.mxu0 0.0
        %1118 = vmatpush1.msra.mxu0 0.0
        %1119 = vmatprep.subr.mxu0 0.0
        %1120 = vmatpush1.msra.mxu0 0.0
        %1121 = vmatprep.subr.mxu0 0.0
        %1122 = vmatpush1.msra.mxu0 0.0
        %1123 = vmatprep.subr.mxu0 0.0
        %1124 = vmatpush1.msra.mxu0 0.0
        %1125 = vmatprep.subr.mxu0 0.0
        %1126 = vmatpush1.msra.mxu0 %v1084
        %1127 = vmatprep.subr.mxu0 0.0
        %1128 = vmatpush1.msra.mxu0 %v1083
        %1129 = vmatprep.subr.mxu0 0.0
        %1130 = vmatpush1.msra.mxu0 %v1082
        %1131 = vmatprep.subr.mxu0 0.0
        %1132 = vmatpush1.msra.mxu0 %v1081
        %1133 = vmatprep.subr.mxu0 0.0
        %1134 = vmatpush2.msra.mxu0 0.0
        %1135 = vmatprep.subr.mxu0 0.0
        %1136 = vmatpush2.msra.mxu0 0.0
        %1137 = vmatprep.subr.mxu0 0.0
        %1138 = vmatpush2.msra.mxu0 0.0
        %1139 = vmatprep.subr.mxu0 0.0
        %1140 = vmatpush2.msra.mxu0 0.0
        %1141 = vmatprep.subr.mxu0 0.0
        %1142 = vmatpush2.msra.mxu0 0.0
        %1143 = vmatprep.subr.mxu0 0.0
        %1144 = vmatpush2.msra.mxu0 0.0
        %1145 = vmatprep.subr.mxu0 0.0
        %1146 = vmatpush2.msra.mxu0 0.0
        %1147 = vmatprep.subr.mxu0 0.0
        %1148 = vmatpush2.msra.mxu0 0.0
        %1149 = vmatprep.subr.mxu0 0.0
        %1150 = vmatpush2.msra.mxu0 0.0
        %1151 = vmatprep.subr.mxu0 0.0
        %1152 = vmatpush2.msra.mxu0 0.0
        %1153 = vmatprep.subr.mxu0 0.0
        %1154 = vmatpush2.msra.mxu0 0.0
        %1155 = vmatprep.subr.mxu0 0.0
        %1156 = vmatpush2.msra.mxu0 0.0
        %1157 = vmatprep.subr.mxu0 0.0
        %1158 = vmatpush2.msra.mxu0 0.0
        %1159 = vmatprep.subr.mxu0 0.0
        %1160 = vmatpush2.msra.mxu0 0.0
        %1161 = vmatprep.subr.mxu0 0.0
        %1162 = vmatpush2.msra.mxu0 0.0
        %1163 = vmatprep.subr.mxu0 0.0
        %1164 = vmatpush2.msra.mxu0 0.0
        %1165 = vmatprep.mubr.f32.mxu0 0.0
        %1166 = vmatmul.mubr.f32.gmra.mxu0 %v1093
        %v1167 = vpop.f32.mrf.mxu0
        %v1168 = vadd.f32 %v1090, %v1167
        %v1169 = vpop.f32.mrf.mxu0
        %1170 = vmatprep.mubr.f32.mxu0 0.0
        %1171 = vmatmul.mubr.f32.gmra.mxu0 %v1096
        %v1172 = vpop.f32.mrf.mxu0
        %v1173 = vadd.f32 %v1090, %v1172
        %v1174 = vpop.f32.mrf.mxu0
        %1175 = vmatprep.mubr.f32.mxu0 0.0
        %1176 = vmatmul.mubr.f32.gmra.mxu0 %v1099
        %v1177 = vpop.f32.mrf.mxu0
        %v1178 = vadd.f32 %v1090, %v1177
        %v1179 = vpop.f32.mrf.mxu0
        %1180 = vdwg.mxu0
        %1181 = vst.msk [vmem:[%s342] sm:$0xff] %vm357, %v1168
        %1182 = vst.msk [vmem:[%s342 + $0x8] sm:$0xff] %vm357, %v1173
        %vm1183 = vcmask 253952
        %1184 = vst.msk [vmem:[%s342 + $0x10] sm:$0x1] %vm1183, %v1178
        %p1185 = scmp.lt.s32.totalorder %s24, 1
        %s1186 = scalar_select %p1185, %s24, 1
        %s1187 = smul.addr %s1186, 3
        %s1188 = smul.addr %s1187, 8
        %s1189 = scalar_lea.vmem %s8, %s1188
        %s1190 = sand.u32 %s231, 1
        %s1191 = scalar_lea.sflag [#allocation3], %s1190
        %s1192 = sand.u32 %s231, 1
        %s1193 = scalar_lea.vmem [#allocation2], %s1192
        // Predicated region
        $region53: #{tpu_custom_call.1} parent=51 // pred_check
          %p1194 = pneg %p215
        $region54: #{tpu_custom_call.1} parent=51 // pred_check_branch
          %1196 = sbr.rel (%p1194) target = $region56
        $region55: #{tpu_custom_call.1} parent=51 // pred_region
          _
        $region56: #{tpu_custom_call.1} parent=51 // pred_fallthru
          _
        // Predicated region
        $region57: #{tpu_custom_call.1} parent=51 // pred_check
          %p1197 = pneg %p241
        $region58: #{tpu_custom_call.1} parent=51 // pred_check_branch
          %1199 = sbr.rel (%p1197) target = $region60
        $region59: #{tpu_custom_call.1} parent=51 // pred_region
          %s1201 = ssub.s32 16, 16
          %1202 = vsyncadd %s1191, %s1201
          %s1203 = smul.addr %s24, 16
          %s1204 = scalar_lea.hbm %s9, %s1203
          %s1206 = sshll.u32 %s1193, 4
          %s1207 = int_to_ptr.vmem [resolvable:$true] %s1206
          %1209 = dma.vmem_to_hbm [thread:$0]  %s1207, 16, %s1204, %s1191
        $region60: #{tpu_custom_call.1} parent=51 // pred_fallthru
          _
      $region52: #{tpu_custom_call.1} parent=5 // pred_fallthru
        _
      %p1210 = scmp.le.s32.totalorder 2, %s19
      // Predicated region
      $region61: #{tpu_custom_call.1} parent=5 // pred_check
        %p1211 = pneg %p1210
      $region62: #{tpu_custom_call.1} parent=5 // pred_check_branch
        %1213 = sbr.rel (%p1211) target = $region64
      $region63: #{tpu_custom_call.1} parent=5 // pred_region
        %s1214 = ssub.s32 %s19, 2
        // Predicated region
        $region65: #{tpu_custom_call.1} parent=63 // pred_check
          %p1215 = pneg %p221
        $region66: #{tpu_custom_call.1} parent=63 // pred_check_branch
          %1217 = sbr.rel (%p1215) target = $region68
        $region67: #{tpu_custom_call.1} parent=63 // pred_region
          %p1218 = scmp.lt.s32.totalorder %s25, 1
          %s1219 = scalar_select %p1218, %s25, 1
          %s1220 = smul.addr %s1219, 3
          %s1221 = smul.addr %s1220, 8
          %s1222 = scalar_lea.vmem %s8, %s1221
        $region68: #{tpu_custom_call.1} parent=63 // pred_fallthru
          _
        // Predicated region
        $region69: #{tpu_custom_call.1} parent=63 // pred_check
          %p1223 = pneg %p247
        $region70: #{tpu_custom_call.1} parent=63 // pred_check_branch
          %1225 = sbr.rel (%p1223) target = $region72
        $region71: #{tpu_custom_call.1} parent=63 // pred_region
          %s1226 = sand.u32 %s232, 1
          %s1227 = scalar_lea.sflag [#allocation3], %s1226
          %s1228 = sand.u32 %s232, 1
          %s1229 = scalar_lea.vmem [#allocation2], %s1228
          %1230 = dma.done %s1227, 16
        $region72: #{tpu_custom_call.1} parent=63 // pred_fallthru
          _
      $region64: #{tpu_custom_call.1} parent=5 // pred_fallthru
        _
    $region6: #{tpu_custom_call.1} parent=1 // loop_footer
      %s23 = sadd.s32 1, %s19
    $region7: #{tpu_custom_call.1} parent=1 // loop_footer_branch
      %18 = sbr.rel target = $region3
    $region8: #{tpu_custom_call.1} parent=1 // loop_exit
      _
    %1231 = vsyncpa [#allocation3], 1
    %s1232 = scalar_lea.sflag [#allocation3], 1
    %1233 = vsyncpa %s1232, 1

</llo_original>
